<compile_context>
chip_gen: v7x
topology: tpu7x:2x2x1
jax: 0.10.0
libtpu: 0.0.40
codegen_flags: <defaults>
</compile_context>

<pallas_src>
import jax
import jax.numpy as jnp
from jax import lax
from jax.experimental import pallas as pl
from jax.experimental.pallas import tpu as pltpu


# ----------------------------------------------------------------------------
# int32 constants (two's-complement wrapped so they are valid jnp.int32)
def _to_i32(v):
    v &= 0xFFFFFFFF
    return v - (1 << 32) if v >= (1 << 31) else v


_GOLD = _to_i32(0x9E3779B9)   # splitmix golden gamma
_M1 = _to_i32(0x7FEB352D)     # lowbias32 multipliers
_M2 = _to_i32(0x846CA68B)
_TWO_PI = 6.283185307179586


def _lsr(x, shift, mask):
    # Logical right shift for int32: arithmetic shift, then clear the
    # sign-extended high bits (mask has exactly 32-shift low bits set).
    return jnp.bitwise_and(jnp.right_shift(x, shift), mask)


def _mix32(x):
    # "lowbias32" avalanche hash; wrapping int32 arithmetic == uint32 mod 2^32.
    x = x ^ _lsr(x, 16, 0xFFFF)
    x = x * jnp.int32(_M1)
    x = x ^ _lsr(x, 15, 0x1FFFF)
    x = x * jnp.int32(_M2)
    x = x ^ _lsr(x, 16, 0xFFFF)
    return x


def _bits_to_open01(h):
    # Top 23 bits -> float32 uniform in the open interval (0, 1).
    b = _lsr(h, 9, 0x7FFFFF)
    return (b.astype(jnp.float32) + 0.5) * (1.0 / 8388608.0)


# ----------------------------------------------------------------------------
# Kernel
def _normal_sample_kernel(seed_ref, x_ref, stds_ref, out_ref):
    tb, n = x_ref.shape

    # Unique per-element counter across the whole (padded, folded) array:
    # distinct noise for every element regardless of grid step / core.
    row = pl.program_id(0) * tb + lax.broadcasted_iota(jnp.int32, (tb, n), 0)
    col = lax.broadcasted_iota(jnp.int32, (tb, n), 1)
    idx = row * n + col

    # Two consecutive splitmix-style states per element -> two uniforms.
    base = seed_ref[0] + (idx * 2) * jnp.int32(_GOLD)
    u1 = _bits_to_open01(_mix32(base))
    u2 = _bits_to_open01(_mix32(base + jnp.int32(_GOLD)))

    # Box-Muller: exact standard-normal noise using only generic jnp ops.
    r = jnp.sqrt(-2.0 * jnp.log(u1))
    noise = r * jnp.cos(jnp.float32(_TWO_PI) * u2)

    # scale = exp(stds): kept as (1, n); broadcasts implicitly over rows.
    scale = jnp.exp(stds_ref[...])
    sample = x_ref[...].astype(jnp.float32) + scale * noise
    out_ref[...] = sample.astype(out_ref.dtype)


# ----------------------------------------------------------------------------
# Wrapper
def _round_up(v, m):
    return (v + m - 1) // m * m


def normal_sample(x, stds, seed, *, block_rows=256):
    """Sample from Normal(loc=x, scale=exp(stds)).  x: (B, N), stds: (N,)."""
    B, N = x.shape
    out_dtype = x.dtype

    # ---- lane-dense layout plumbing ----------------------------------------
    # Fold batch rows into the 128-lane axis when the feature dim is narrow.
    if N < 128 and 128 % N == 0:
        fold = 128 // N
    else:
        fold = 1
    n_lane = N * fold
    n_pad = _round_up(n_lane, 128)

    rows = -(-B // fold)                                    # folded row count
    tb = _round_up(min(block_rows, _round_up(rows, 8)), 8)  # sublane-aligned tile
    rows_pad = _round_up(rows, tb)
    b_pad = rows_pad * fold

    xp = jnp.pad(x, ((0, b_pad - B), (0, 0))).reshape(rows_pad, n_lane)
    if n_pad != n_lane:
        xp = jnp.pad(xp, ((0, 0), (0, n_pad - n_lane)))

    stds_row = jnp.tile(stds.astype(jnp.float32), fold)
    if n_pad != n_lane:
        stds_row = jnp.pad(stds_row, (0, n_pad - n_lane))
    stds2d = stds_row.reshape(1, n_pad)

    seed_arr = jnp.asarray([seed], dtype=jnp.int32)

    grid = (rows_pad // tb,)
    out = pl.pallas_call(
        _normal_sample_kernel,
        out_shape=jax.ShapeDtypeStruct((rows_pad, n_pad), out_dtype),
        grid=grid,
        in_specs=[
            pl.BlockSpec(memory_space=pltpu.MemorySpace.SMEM),   # scalar seed
            pl.BlockSpec((tb, n_pad), lambda i: (i, 0)),          # x tile
            pl.BlockSpec((1, n_pad), lambda i: (0, 0)),           # stds (VMEM-resident)
        ],
        out_specs=pl.BlockSpec((tb, n_pad), lambda i: (i, 0)),
        compiler_params=pltpu.CompilerParams(
            dimension_semantics=("parallel",),     # tiles independent -> megacore-safe
            vmem_limit_bytes=32 * 1024 * 1024,     # v7x-safe scoped budget
        ),
    )(seed_arr, xp, stds2d)

    out = out[:, :n_lane].reshape(b_pad, N)[:B]
    return out


# ----------------------------------------------------------------------------
if __name__ == "__main__":
    key = jax.random.PRNGKey(0)

    batch = 64
    num_outputs = 32

    # Deterministic example input (the "loc" of the distribution).
    x = jax.random.normal(key, (batch, num_outputs), dtype=jnp.float32)
    # Matches the PyTorch module init: stds = zeros(num_outputs) -> scale = 1.
    stds = jnp.zeros((num_outputs,), dtype=jnp.float32)

    # block_rows=8 -> multi-step grid, exercising per-tile independent noise.
    out = normal_sample(x, stds, seed=0, block_rows=8)
    out = jax.block_until_ready(out)

    assert out.shape == x.shape and out.dtype == x.dtype
    assert bool(jnp.all(jnp.isfinite(out)))

    # Loose statistical sanity: noise = out - x should be ~N(0, 1).
    noise = out - x
    m = float(jnp.mean(noise))
    s = float(jnp.std(noise))
    assert abs(m) < 0.2, m
    assert 0.8 < s < 1.2, s

    # Determinism w.r.t. the seed.
    out2 = jax.block_until_ready(normal_sample(x, stds, seed=0, block_rows=8))
    assert bool(jnp.all(out == out2))

    print("KERNEL_OK")
</pallas_src>

<mosaic_0001>
module attributes {stable_mosaic.version = 11 : i64} {
  func.func @_normal_sample_kernel(%arg0: i32, %arg1: memref<1xi32, #tpu.memory_space<smem>>, %arg2: memref<8x128xf32, #tpu.memory_space<vmem>>, %arg3: memref<1x128xf32, #tpu.memory_space<vmem>>, %arg4: memref<8x128xf32, #tpu.memory_space<vmem>>) attributes {dimension_semantics = [#tpu.dimension_semantics<parallel>], iteration_bounds = array<i64: 2>, scalar_prefetch = 0 : i64, scratch_operands = 0 : i64, tpu.core_type = #tpu.core_type<tc>, window_params = [{transform_indices = @transform_0, window_bounds = array<i64: 1>}, {transform_indices = @transform_1, window_bounds = array<i64: 8, 128>}, {pipeline_mode = #tpu.pipeline_mode<synchronous>, transform_indices = @transform_2, window_bounds = array<i64: 1, 128>}, {transform_indices = @transform_3, window_bounds = array<i64: 8, 128>}]} {
    %c8_i32 = arith.constant 8 : i32
    %0 = arith.muli %arg0, %c8_i32 : i32
    %1 = tpu.iota {dimensions = array<i32: 0>} : vector<8x128xi32>
    %2 = vector.broadcast %0 : i32 to vector<8x128xi32>
    %3 = arith.addi %2, %1 : vector<8x128xi32>
    %4 = tpu.iota {dimensions = array<i32: 1>} : vector<8x128xi32>
    %c128_i32 = arith.constant 128 : i32
    %5 = vector.broadcast %c128_i32 : i32 to vector<8x128xi32>
    %6 = arith.muli %3, %5 : vector<8x128xi32>
    %7 = arith.addi %6, %4 : vector<8x128xi32>
    %c0 = arith.constant 0 : index
    %8 = memref.load %arg1[%c0] : memref<1xi32, #tpu.memory_space<smem>>
    %c2_i32 = arith.constant 2 : i32
    %9 = vector.broadcast %c2_i32 : i32 to vector<8x128xi32>
    %10 = arith.muli %7, %9 : vector<8x128xi32>
    %c-1640531527_i32 = arith.constant -1640531527 : i32
    %11 = vector.broadcast %c-1640531527_i32 : i32 to vector<8x128xi32>
    %12 = arith.muli %10, %11 : vector<8x128xi32>
    %13 = vector.broadcast %8 : i32 to vector<8x128xi32>
    %14 = arith.addi %13, %12 : vector<8x128xi32>
    %c16_i32 = arith.constant 16 : i32
    %15 = vector.broadcast %c16_i32 : i32 to vector<8x128xi32>
    %16 = arith.shrsi %14, %15 : vector<8x128xi32>
    %c65535_i32 = arith.constant 65535 : i32
    %17 = vector.broadcast %c65535_i32 : i32 to vector<8x128xi32>
    %18 = arith.andi %16, %17 : vector<8x128xi32>
    %19 = arith.xori %14, %18 : vector<8x128xi32>
    %c2146121005_i32 = arith.constant 2146121005 : i32
    %20 = vector.broadcast %c2146121005_i32 : i32 to vector<8x128xi32>
    %21 = arith.muli %19, %20 : vector<8x128xi32>
    %c15_i32 = arith.constant 15 : i32
    %22 = vector.broadcast %c15_i32 : i32 to vector<8x128xi32>
    %23 = arith.shrsi %21, %22 : vector<8x128xi32>
    %c131071_i32 = arith.constant 131071 : i32
    %24 = vector.broadcast %c131071_i32 : i32 to vector<8x128xi32>
    %25 = arith.andi %23, %24 : vector<8x128xi32>
    %26 = arith.xori %21, %25 : vector<8x128xi32>
    %c-2073254261_i32 = arith.constant -2073254261 : i32
    %27 = vector.broadcast %c-2073254261_i32 : i32 to vector<8x128xi32>
    %28 = arith.muli %26, %27 : vector<8x128xi32>
    %c16_i32_0 = arith.constant 16 : i32
    %29 = vector.broadcast %c16_i32_0 : i32 to vector<8x128xi32>
    %30 = arith.shrsi %28, %29 : vector<8x128xi32>
    %c65535_i32_1 = arith.constant 65535 : i32
    %31 = vector.broadcast %c65535_i32_1 : i32 to vector<8x128xi32>
    %32 = arith.andi %30, %31 : vector<8x128xi32>
    %33 = arith.xori %28, %32 : vector<8x128xi32>
    %c9_i32 = arith.constant 9 : i32
    %34 = vector.broadcast %c9_i32 : i32 to vector<8x128xi32>
    %35 = arith.shrsi %33, %34 : vector<8x128xi32>
    %c8388607_i32 = arith.constant 8388607 : i32
    %36 = vector.broadcast %c8388607_i32 : i32 to vector<8x128xi32>
    %37 = arith.andi %35, %36 : vector<8x128xi32>
    %38 = arith.sitofp %37 : vector<8x128xi32> to vector<8x128xf32>
    %cst = arith.constant 5.000000e-01 : f32
    %39 = vector.broadcast %cst : f32 to vector<8x128xf32>
    %40 = arith.addf %38, %39 : vector<8x128xf32>
    %cst_2 = arith.constant 1.1920929E-7 : f32
    %41 = vector.broadcast %cst_2 : f32 to vector<8x128xf32>
    %42 = arith.mulf %40, %41 : vector<8x128xf32>
    %c-1640531527_i32_3 = arith.constant -1640531527 : i32
    %43 = vector.broadcast %c-1640531527_i32_3 : i32 to vector<8x128xi32>
    %44 = arith.addi %14, %43 : vector<8x128xi32>
    %c16_i32_4 = arith.constant 16 : i32
    %45 = vector.broadcast %c16_i32_4 : i32 to vector<8x128xi32>
    %46 = arith.shrsi %44, %45 : vector<8x128xi32>
    %c65535_i32_5 = arith.constant 65535 : i32
    %47 = vector.broadcast %c65535_i32_5 : i32 to vector<8x128xi32>
    %48 = arith.andi %46, %47 : vector<8x128xi32>
    %49 = arith.xori %44, %48 : vector<8x128xi32>
    %c2146121005_i32_6 = arith.constant 2146121005 : i32
    %50 = vector.broadcast %c2146121005_i32_6 : i32 to vector<8x128xi32>
    %51 = arith.muli %49, %50 : vector<8x128xi32>
    %c15_i32_7 = arith.constant 15 : i32
    %52 = vector.broadcast %c15_i32_7 : i32 to vector<8x128xi32>
    %53 = arith.shrsi %51, %52 : vector<8x128xi32>
    %c131071_i32_8 = arith.constant 131071 : i32
    %54 = vector.broadcast %c131071_i32_8 : i32 to vector<8x128xi32>
    %55 = arith.andi %53, %54 : vector<8x128xi32>
    %56 = arith.xori %51, %55 : vector<8x128xi32>
    %c-2073254261_i32_9 = arith.constant -2073254261 : i32
    %57 = vector.broadcast %c-2073254261_i32_9 : i32 to vector<8x128xi32>
    %58 = arith.muli %56, %57 : vector<8x128xi32>
    %c16_i32_10 = arith.constant 16 : i32
    %59 = vector.broadcast %c16_i32_10 : i32 to vector<8x128xi32>
    %60 = arith.shrsi %58, %59 : vector<8x128xi32>
    %c65535_i32_11 = arith.constant 65535 : i32
    %61 = vector.broadcast %c65535_i32_11 : i32 to vector<8x128xi32>
    %62 = arith.andi %60, %61 : vector<8x128xi32>
    %63 = arith.xori %58, %62 : vector<8x128xi32>
    %c9_i32_12 = arith.constant 9 : i32
    %64 = vector.broadcast %c9_i32_12 : i32 to vector<8x128xi32>
    %65 = arith.shrsi %63, %64 : vector<8x128xi32>
    %c8388607_i32_13 = arith.constant 8388607 : i32
    %66 = vector.broadcast %c8388607_i32_13 : i32 to vector<8x128xi32>
    %67 = arith.andi %65, %66 : vector<8x128xi32>
    %68 = arith.sitofp %67 : vector<8x128xi32> to vector<8x128xf32>
    %cst_14 = arith.constant 5.000000e-01 : f32
    %69 = vector.broadcast %cst_14 : f32 to vector<8x128xf32>
    %70 = arith.addf %68, %69 : vector<8x128xf32>
    %cst_15 = arith.constant 1.1920929E-7 : f32
    %71 = vector.broadcast %cst_15 : f32 to vector<8x128xf32>
    %72 = arith.mulf %70, %71 : vector<8x128xf32>
    %73 = math.log %42 : vector<8x128xf32>
    %cst_16 = arith.constant -2.000000e+00 : f32
    %74 = vector.broadcast %cst_16 : f32 to vector<8x128xf32>
    %75 = arith.mulf %74, %73 : vector<8x128xf32>
    %76 = math.sqrt %75 : vector<8x128xf32>
    %cst_17 = arith.constant 6.28318548 : f32
    %77 = vector.broadcast %cst_17 : f32 to vector<8x128xf32>
    %78 = arith.mulf %77, %72 : vector<8x128xf32>
    %79 = math.cos %78 : vector<8x128xf32>
    %80 = arith.mulf %76, %79 : vector<8x128xf32>
    %c0_18 = arith.constant 0 : index
    %c0_19 = arith.constant 0 : index
    %81 = vector.load %arg3[%c0_18, %c0_19] : memref<1x128xf32, #tpu.memory_space<vmem>>, vector<1x128xf32>
    %82 = math.exp %81 : vector<1x128xf32>
    %c0_20 = arith.constant 0 : index
    %c0_21 = arith.constant 0 : index
    %83 = vector.load %arg2[%c0_20, %c0_21] : memref<8x128xf32, #tpu.memory_space<vmem>>, vector<8x128xf32>
    %84 = vector.broadcast %82 : vector<1x128xf32> to vector<8x128xf32>
    %85 = arith.mulf %84, %80 : vector<8x128xf32>
    %86 = arith.addf %83, %85 : vector<8x128xf32>
    %c0_22 = arith.constant 0 : index
    %c0_23 = arith.constant 0 : index
    %87 = vector.load %arg4[%c0_22, %c0_23] : memref<8x128xf32, #tpu.memory_space<vmem>>, vector<8x128xf32>
    tpu.vector_store %arg4[%c0_22, %c0_23], %86 {strides = array<i32>} : memref<8x128xf32, #tpu.memory_space<vmem>>, vector<8x128xf32>,
    return
  }
  func.func @transform_0(%arg0: i32) -> i32 {
    %c0_i32 = arith.constant 0 : i32
    %c0_i32_0 = arith.constant 0 : i32
    return %c0_i32 : i32
  }
  func.func @transform_1(%arg0: i32) -> (i32, i32) {
    %c0_i32 = arith.constant 0 : i32
    %c0_i32_0 = arith.constant 0 : i32
    return %arg0, %c0_i32 : i32, i32
  }
  func.func @transform_2(%arg0: i32) -> (i32, i32) {
    %c0_i32 = arith.constant 0 : i32
    %c0_i32_0 = arith.constant 0 : i32
    %c0_i32_1 = arith.constant 0 : i32
    return %c0_i32, %c0_i32_0 : i32, i32
  }
  func.func @transform_3(%arg0: i32) -> (i32, i32) {
    %c0_i32 = arith.constant 0 : i32
    %c0_i32_0 = arith.constant 0 : i32
    return %arg0, %c0_i32 : i32, i32
  }
}

</mosaic_0001>

<llo_original>
// kernel: tpu_custom_call.1
$region0: #{tpu_custom_call.1}
  #allocation0 [shape = 'u32[]', space=smem, size = 0x4, offset = 0x4, fixed_abs, tag = 'smem constant byte address 0x4 - core index']
  #allocation1 [shape = 'u32[144,128]{1,0:T(1,128)}', space=vmem, size = 0x12000, scoped, tag = 'internal scratch']
  #allocation2 [shape = 's32[1]{0:T(128)S(6)}', space=smem, size = 0x200, scoped, tag = 'scoped memory for tpu_custom_call.1']
  %s0 = inlined_call_operand.<no memory space> [shape: s32[1], index: 0, kind: input, shape index: {}]
  %s1 = inlined_call_operand.hbm [shape: f32[16,128], index: 1, kind: input, shape index: {}]
  %s2 = inlined_call_operand.vmem [shape: f32[1,128], index: 2, kind: input, shape index: {}]
  %s3 = inlined_call_operand.hbm [shape: f32[16,128], index: 3, kind: output, shape index: {}]
  %s4 = sld [smem:[#allocation0]]
  $region49: #{tpu_custom_call.1} parent=0
    _
  %s6 = ssub.s32 1, %s4
  %s7 = scalar_select 0, %s6, %s4
  %8 = sst [smem:[#allocation2]] %s0
  $region1: #{tpu_custom_call.1} parent=0
    #allocation3 [shape = 'u8[8192]{0}', space=vmem, size = 0x2000, scoped, tag = 'input window, operand 1']
    #allocation4 [shape = 's32[2]{0}', space=sflag, size = 0x8, scoped, tag = 'scoped memory for tpu_custom_call.1']
    #allocation5 [shape = 's32[2]{0}', space=sflag, size = 0x8, scoped, tag = 'scoped memory for tpu_custom_call.1']
    #allocation6 [shape = 'u8[8192]{0}', space=vmem, size = 0x2000, scoped, tag = 'output window, operand 0']
    %9 = vsyncpa [#allocation4], 0
    %s10 = scalar_lea.sflag [#allocation4], 1
    %11 = vsyncpa %s10, 0
    %12 = vsyncpa [#allocation5], 0
    %s13 = scalar_lea.sflag [#allocation5], 1
    %14 = vsyncpa %s13, 0
    loop: start=0, step=1, limit=4
    $region2: #{tpu_custom_call.1} parent=1 // loop_pre_header
      _
    $region3: #{tpu_custom_call.1} parent=1 // loop_header
      %s16 = sphi 0, %s20
      %p17 = scmp.ge.s32.totalorder %s16, 4
      %s24 = sphi 0, %s24
      %s26 = sphi 0, %s24
      %s27 = sphi 0, %s26
      %s41 = sphi 0, %s27
      %s47 = sphi 0, %s49
      %s50 = sphi 0, %s47
      %s51 = sphi 0, %s50
      %s67 = sphi 0, %s51
      %s71 = sphi 0, %s71
      %s73 = sphi 0, %s71
      %s74 = sphi 0, %s73
      %s88 = sphi 0, %s74
      %s94 = sphi 0, %s96
      %s97 = sphi 0, %s94
      %s98 = sphi 0, %s97
      %s114 = sphi 0, %s98
    $region4: #{tpu_custom_call.1} parent=1 // loop_header_branch
      %19 = sbr.rel (%p17) target = $region8
    $region5: #{tpu_custom_call.1} parent=1 // loop_body
      %s21 = ssub.s32 %s16, 1
      %s22 = ssub.s32 %s16, 2
      %s23 = sadd.s32 %s16, 1
      %s25 = sadd.s32 %s24, 1
      %p28 = scmp.eq.s32.totalorder %s16, 1
      %p29 = scmp.ne.s32.totalorder %s24, %s26
      %p30 = scmp.eq.s32.totalorder %s16, 0
      %p31 = por %p29, %p30
      %p32 = scmp.ne.s32.totalorder %s24, %s26
      %p33 = scmp.eq.s32.totalorder %s21, 1
      %p34 = por %p32, %p33
      %p35 = scmp.ne.s32.totalorder %s26, %s27
      %p36 = scmp.eq.s32.totalorder %s21, 0
      %p37 = por %p35, %p36
      %p38 = scmp.ne.s32.totalorder %s26, %s27
      %p39 = scmp.eq.s32.totalorder %s22, 1
      %p40 = por %p38, %p39
      %p42 = scmp.ne.s32.totalorder %s27, %s41
      %p43 = scmp.eq.s32.totalorder %s22, 0
      %p44 = por %p42, %p43
      %s45 = ssub.s32 %s16, %s23
      %p46 = scmp.eq.s32.totalorder %s45, 0
      %s48 = sadd.s32 %s47, 1
      %s49 = scalar_select %p46, %s47, %s48
      %p52 = pneg %p46
      %p53 = scmp.eq.s32.totalorder %s16, 1
      %p54 = por %p52, %p53
      %p55 = scmp.ne.s32.totalorder %s47, %s50
      %p56 = scmp.eq.s32.totalorder %s16, 0
      %p57 = por %p55, %p56
      %p58 = scmp.ne.s32.totalorder %s47, %s50
      %p59 = scmp.eq.s32.totalorder %s21, 1
      %p60 = por %p58, %p59
      %p61 = scmp.ne.s32.totalorder %s50, %s51
      %p62 = scmp.eq.s32.totalorder %s21, 0
      %p63 = por %p61, %p62
      %p64 = scmp.ne.s32.totalorder %s50, %s51
      %p65 = scmp.eq.s32.totalorder %s22, 1
      %p66 = por %p64, %p65
      %p68 = scmp.ne.s32.totalorder %s51, %s67
      %p69 = scmp.eq.s32.totalorder %s22, 0
      %p70 = por %p68, %p69
      %s72 = sadd.s32 %s71, 1
      %p75 = scmp.eq.s32.totalorder %s16, 1
      %p76 = scmp.ne.s32.totalorder %s71, %s73
      %p77 = scmp.eq.s32.totalorder %s16, 0
      %p78 = por %p76, %p77
      %p79 = scmp.ne.s32.totalorder %s71, %s73
      %p80 = scmp.eq.s32.totalorder %s21, 1
      %p81 = por %p79, %p80
      %p82 = scmp.ne.s32.totalorder %s73, %s74
      %p83 = scmp.eq.s32.totalorder %s21, 0
      %p84 = por %p82, %p83
      %p85 = scmp.ne.s32.totalorder %s73, %s74
      %p86 = scmp.eq.s32.totalorder %s22, 1
      %p87 = por %p85, %p86
      %p89 = scmp.ne.s32.totalorder %s74, %s88
      %p90 = scmp.eq.s32.totalorder %s22, 0
      %p91 = por %p89, %p90
      %s92 = ssub.s32 %s16, %s23
      %p93 = scmp.eq.s32.totalorder %s92, 0
      %s95 = sadd.s32 %s94, 1
      %s96 = scalar_select %p93, %s94, %s95
      %p99 = pneg %p93
      %p100 = scmp.eq.s32.totalorder %s16, 1
      %p101 = por %p99, %p100
      %p102 = scmp.ne.s32.totalorder %s94, %s97
      %p103 = scmp.eq.s32.totalorder %s16, 0
      %p104 = por %p102, %p103
      %p105 = scmp.ne.s32.totalorder %s94, %s97
      %p106 = scmp.eq.s32.totalorder %s21, 1
      %p107 = por %p105, %p106
      %p108 = scmp.ne.s32.totalorder %s97, %s98
      %p109 = scmp.eq.s32.totalorder %s21, 0
      %p110 = por %p108, %p109
      %p111 = scmp.ne.s32.totalorder %s97, %s98
      %p112 = scmp.eq.s32.totalorder %s22, 1
      %p113 = por %p111, %p112
      %p115 = scmp.ne.s32.totalorder %s98, %s114
      %p116 = scmp.eq.s32.totalorder %s22, 0
      %p117 = por %p115, %p116
      %p118 = scmp.le.s32.totalorder 1, %s16
      %p119 = scmp.lt.s32.totalorder %s16, 3
      %p120 = pnand %p118, %p119
      %p121 = pneg %p120
      // Predicated region
      $region9: #{tpu_custom_call.1} parent=5 // pred_check
        _
      $region10: #{tpu_custom_call.1} parent=5 // pred_check_branch
        %123 = sbr.rel (%p120) target = $region12
      $region11: #{tpu_custom_call.1} parent=5 // pred_region
        %s124 = ssub.s32 %s16, 1
        // Predicated region
        $region13: #{tpu_custom_call.1} parent=11 // pred_check
          %p125 = pneg %p37
        $region14: #{tpu_custom_call.1} parent=11 // pred_check_branch
          %127 = sbr.rel (%p125) target = $region16
        $region15: #{tpu_custom_call.1} parent=11 // pred_region
          _
        $region16: #{tpu_custom_call.1} parent=11 // pred_fallthru
          _
        // Predicated region
        $region17: #{tpu_custom_call.1} parent=11 // pred_check
          %p128 = pneg %p84
        $region18: #{tpu_custom_call.1} parent=11 // pred_check_branch
          %130 = sbr.rel (%p128) target = $region20
        $region19: #{tpu_custom_call.1} parent=11 // pred_region
          _
        $region20: #{tpu_custom_call.1} parent=11 // pred_fallthru
          _
      $region12: #{tpu_custom_call.1} parent=5 // pred_fallthru
        _
      %p131 = scmp.lt.s32.totalorder %s16, 2
      // Predicated region
      $region21: #{tpu_custom_call.1} parent=5 // pred_check
        %p132 = pneg %p131
      $region22: #{tpu_custom_call.1} parent=5 // pred_check_branch
        %134 = sbr.rel (%p132) target = $region24
      $region23: #{tpu_custom_call.1} parent=5 // pred_region
        // Predicated region
        $region25: #{tpu_custom_call.1} parent=23 // pred_check
          %p135 = pneg %p57
        $region26: #{tpu_custom_call.1} parent=23 // pred_check_branch
          %137 = sbr.rel (%p135) target = $region28
        $region27: #{tpu_custom_call.1} parent=23 // pred_region
          %s138 = sand.u32 %s47, 1
          %s139 = scalar_lea.sflag [#allocation4], %s138
          %s140 = sand.u32 %s47, 1
          %s141 = smul.addr %s140, 8
          %s142 = scalar_lea.vmem [#allocation3], %s141
          %s144 = ssub.s32 128, 128
          %145 = vsyncadd %s139, %s144
          %s146 = smul.addr %s16, 128
          %s147 = scalar_lea.hbm %s1, %s146
          %s149 = sshll.u32 %s142, 4
          %s150 = int_to_ptr.vmem [resolvable:$true] %s149
          %152 = dma.hbm_to_vmem [thread:$0]  %s147, 128, %s150, %s139
        $region28: #{tpu_custom_call.1} parent=23 // pred_fallthru
          _
      $region24: #{tpu_custom_call.1} parent=5 // pred_fallthru
        _
      %p153 = scmp.le.s32.totalorder 1, %s16
      %p154 = scmp.lt.s32.totalorder %s16, 3
      %p155 = pnand %p153, %p154
      %p156 = pneg %p155
      // Predicated region
      $region29: #{tpu_custom_call.1} parent=5 // pred_check
        _
      $region30: #{tpu_custom_call.1} parent=5 // pred_check_branch
        %158 = sbr.rel (%p155) target = $region32
      $region31: #{tpu_custom_call.1} parent=5 // pred_region
        %s159 = ssub.s32 %s16, 1
        %s160 = sand.u32 %s50, 1
        %s161 = scalar_lea.sflag [#allocation4], %s160
        %s162 = sand.u32 %s50, 1
        %s163 = smul.addr %s162, 8
        %s164 = scalar_lea.vmem [#allocation3], %s163
        // Predicated region
        $region33: #{tpu_custom_call.1} parent=31 // pred_check
          %p165 = pneg %p63
        $region34: #{tpu_custom_call.1} parent=31 // pred_check_branch
          %167 = sbr.rel (%p165) target = $region36
        $region35: #{tpu_custom_call.1} parent=31 // pred_region
          %168 = dma.done %s161, 128
        $region36: #{tpu_custom_call.1} parent=31 // pred_fallthru
          _
        %p169 = pneg %p37
        %p170 = pneg %p34
        %s171 = sand.u32 %s50, 1
        %s172 = scalar_lea.sflag [#allocation4], %s171
        %s173 = sand.u32 %s50, 1
        %s174 = smul.addr %s173, 8
        %s175 = scalar_lea.vmem [#allocation3], %s174
        %p176 = pneg %p63
        %p177 = pneg %p60
        %p178 = pneg %p84
        %p179 = pneg %p81
        %p180 = pneg %p110
        %p181 = pneg %p107
        %s182 = sand.u32 %s97, 1
        %s183 = scalar_lea.sflag [#allocation5], %s182
        %s184 = sand.u32 %s97, 1
        %s185 = smul.addr %s184, 8
        %s186 = scalar_lea.vmem [#allocation6], %s185
        %s187 = smul.u32 %s21, 8
        %v188 = vlaneseq
        %v189 = vshrl.u32 %v188, 7
        %v190 = vstv %s187
        %v191 = vadd.s32 %v190, %v189
        %v192 = vlaneseq
        %v193 = vand.u32 %v192, 127
        %v194 = vmul.u32 %v191, 128
        %v195 = vadd.s32 %v194, %v193
        %s196 = sld [smem:[#allocation2]]
        %v197 = vmul.u32 %v195, 2
        %v198 = vmul.u32 %v197, 2654435769
        %v199 = vstv %s196
        %v200 = vadd.s32 %v199, %v198
        %v201 = vshra.s32 %v200, 16
        %v202 = vand.u32 %v201, 65535
        %v203 = vxor.u32 %v200, %v202
        %v204 = vmul.u32 %v203, 2146121005
        %v205 = vshra.s32 %v204, 15
        %v206 = vand.u32 %v205, 131071
        %v207 = vxor.u32 %v204, %v206
        %v208 = vmul.u32 %v207, 2221713035
        %v209 = vshra.s32 %v208, 16
        %v210 = vand.u32 %v209, 65535
        %v211 = vxor.u32 %v208, %v210
        %v212 = vshra.s32 %v211, 9
        %v213 = vand.u32 %v212, 8388607
        %v214 = vcvt.s32.f32 %v213
        %v215 = vadd.f32 %v214, 0.5
        %v216 = vmul.f32 %v215, 1.1920929e-07
        %v217 = vadd.s32 %v200, 2654435769
        %v218 = vshra.s32 %v217, 16
        %v219 = vand.u32 %v218, 65535
        %v220 = vxor.u32 %v217, %v219
        %v221 = vmul.u32 %v220, 2146121005
        %v222 = vshra.s32 %v221, 15
        %v223 = vand.u32 %v222, 131071
        %v224 = vxor.u32 %v221, %v223
        %v225 = vmul.u32 %v224, 2221713035
        %v226 = vshra.s32 %v225, 16
        %v227 = vand.u32 %v226, 65535
        %v228 = vxor.u32 %v225, %v227
        %v229 = vshra.s32 %v228, 9
        %v230 = vand.u32 %v229, 8388607
        %v231 = vcvt.s32.f32 %v230
        %v232 = vadd.f32 %v231, 0.5
        %v233 = vmul.f32 %v232, 1.1920929e-07
        %v234 = vlog2.pop %v216
        %v235 = vmul.f32 %v234, 0.6931472
        %v236 = vmul.f32 %v235, -2.0
        %v237 = vrsqrt.pop %v236
        %v238 = vmul.f32 %v236, %v237
        %vm239 = vcmp.eq.f32.partialorder %v236, inf
        %v240 = vsel %vm239, %v236, %v238
        %vm241 = vcmp.eq.f32.partialorder %v236, 0.0
        %v242 = vand.u32 %v236, 2147483648
        %v243 = vsel %vm241, %v242, %v240
        %v244 = vmul.f32 %v233, 6.2831855
        %v245 = vand.u32 2147483647, %v244
        %vm246 = vcmp.le.f32.partialorder %v245, 0.7853982
        %vm247 = vcmp.lt.s32.totalorder %v244, 0
        %v248 = vand.u32 %v244, 2139095040
        %v249 = vshrl.u32 %v248, 23
        %v250 = vsub.s32 %v249, 127
        %v251 = vand.u32 2147483647, %v244
        %v252 = vand.u32 %v251, 8388607
        %v253 = vor.u32 %v252, 8388608
        %v254 = vsub.s32 0, %v253
        %v255 = vadd.s32 %v250, 1
        %vm256 = vcmp.gt.s32.totalorder %v255, 0
        %v257 = vsel %vm256, %v255, 0
        %v258 = vshrl.u32 %v257, 5
        %v259 = vand.u32 %v257, 31
        %v260 = vsub.s32 32, %v259
        %v261 = vshrl.u32 683565275, %v260
        %v262 = vshll.u32 683565275, %v259
        %v263 = vshrl.u32 2475754826, %v260
        %v264 = vor.u32 %v262, %v263
        %v265 = vshll.u32 2475754826, %v259
        %v266 = vshrl.u32 2131351028, %v260
        %v267 = vor.u32 %v265, %v266
        %v268 = vshll.u32 2131351028, %v259
        %v269 = vshrl.u32 2102212464, %v260
        %v270 = vor.u32 %v268, %v269
        %v271 = vshll.u32 2102212464, %v259
        %v272 = vshrl.u32 920167782, %v260
        %v273 = vor.u32 %v271, %v272
        %v274 = vshll.u32 920167782, %v259
        %v275 = vshrl.u32 1326507024, %v260
        %v276 = vor.u32 %v274, %v275
        %vm277 = vcmp.lt.s32.totalorder %v258, 1
        %vm278 = vcmp.lt.s32.totalorder %v258, 2
        %vm279 = vcmp.lt.s32.totalorder %v258, 3
        %vm280 = vcmp.lt.s32.totalorder %v258, 4
        %v281 = vsel %vm277, %v261, %v264
        %v282 = vsel %vm280, %v270, 2102212464
        %v283 = vsel %vm279, %v267, %v282
        %v284 = vsel %vm278, %v281, %v283
        %v285 = vsel %vm277, %v264, %v267
        %v286 = vsel %vm280, %v273, 920167782
        %v287 = vsel %vm279, %v270, %v286
        %v288 = vsel %vm278, %v285, %v287
        %v289 = vsel %vm277, %v267, %v270
        %v290 = vsel %vm280, %v276, 1326507024
        %v291 = vsel %vm279, %v273, %v290
        %v292 = vsel %vm278, %v289, %v291
        %v293 = vshll.u32 %v253, 8
        %v294 = vmul.u32.u64.compose %v293, %v292
        %v295 = vextract.low.u32 %v294
        %v296 = vextract.high.u32 %v294
        %v297 = vmul.u32.u64.compose %v293, %v288
        %v298 = vextract.low.u32 %v297
        %v299 = vextract.high.u32 %v297
        %v300 = vmul.u32 %v293, %v284
        %v301 = vadd.s32 %v296, %v298
        %vm302 = vc.u32 %v296, %v298
        %v303 = vadd.s32 %v299, 1
        %v304 = vsel %vm302, %v303, %v299
        %v305 = vadd.s32 %v300, %v304
        %v306 = vadd.s32 %v305, 536870912
        %v307 = vshrl.u32 %v306, 30
        %v308 = vshll.u32 %v307, 30
        %v309 = vsub.s32 %v305, %v308
        %vm310 = vcmp.lt.s32.totalorder %v309, 0
        %v311 = vsub.s32 0, %v309
        %v312 = vsel %vm310, %v311, %v309
        %v313 = vclz %v312
        %v314 = vsub.s32 %v313, 2
        %vm315 = vcmp.gt.s32.totalorder 0, %v314
        %v316 = vsel %vm315, 0, %v314
        %v317 = vsub.s32 32, %v316
        %v318 = vshll.u32 %v309, %v316
        %v319 = vshrl.u32 %v301, %v317
        %v320 = vor.u32 %v318, %v319
        %v321 = vsub.s32 4294967266, %v316
        %v322 = vadd.s32 %v321, 127
        %v323 = vshll.u32 %v322, 23
        %v324 = vor.u32 4788187, %v323
        %v325 = vand.u32 2147483647, %v324
        %v327 = vcvt.s32.f32 %v320
        %v328 = vmul.f32 %v327, %v325
        %v329 = vxor.u32 %v328, 2147483648
        %v330 = vsel %vm247, %v329, %v328
        %v331 = vsub.s32 4, %v307
        %v332 = vsel %vm247, %v331, %v307
        %v333 = vsel %vm246, %v244, %v330
        %v334 = vsel %vm246, 0, %v332
        %v335 = vcosq.f32.pop %v333
        %v336 = vsinq.f32.pop %v333
        %vm337 = vweird.f32 %v244
        %v338 = vand.u32 %v334, 3
        %vm339 = vcmp.lt.s32.totalorder %v338, 2
        %vm340 = vcmp.eq.s32.totalorder %v338, 0
        %v341 = vxor.u32 %v336, 2147483648
        %v342 = vsel %vm340, %v335, %v341
        %vm343 = vcmp.eq.s32.totalorder %v338, 2
        %v344 = vxor.u32 %v335, 2147483648
        %v345 = vsel %vm343, %v344, %v336
        %v346 = vsel %vm339, %v342, %v345
        %v347 = vsel %vm337, nan, %v346
        %v348 = vmul.f32 %v243, %v347
        %v349 = vld [vmem:[%s2] sm:$0x1]
        %v350 = vmul.f32 %v349, 1.442695
        %v351 = vpow.pop %v350
        %v352 = vld [vmem:[%s164] sm:$0xff]
        %v354 = vlaneseq
        %v355 = vshrl.u32 %v354, 7
        %v356 = vsub.s32 0, %v355
        %v357 = vrot.slane %v351, %v356
        %v359 = vmul.f32 %v357, %v348
        %v360 = vadd.f32 %v352, %v359
        %361 = vst [vmem:[%s186] sm:$0xff] %v360
        %s362 = sand.u32 %s97, 1
        %s363 = scalar_lea.sflag [#allocation5], %s362
        %s364 = sand.u32 %s97, 1
        %s365 = smul.addr %s364, 8
        %s366 = scalar_lea.vmem [#allocation6], %s365
        // Predicated region
        $region37: #{tpu_custom_call.1} parent=31 // pred_check
          %p367 = pneg %p107
        $region38: #{tpu_custom_call.1} parent=31 // pred_check_branch
          %369 = sbr.rel (%p367) target = $region40
        $region39: #{tpu_custom_call.1} parent=31 // pred_region
          %s371 = ssub.s32 128, 128
          %372 = vsyncadd %s363, %s371
          %s373 = smul.addr %s21, 128
          %s374 = scalar_lea.hbm %s3, %s373
          %s376 = sshll.u32 %s366, 4
          %s377 = int_to_ptr.vmem [resolvable:$true] %s376
          %379 = dma.vmem_to_hbm [thread:$0]  %s377, 128, %s374, %s363
        $region40: #{tpu_custom_call.1} parent=31 // pred_fallthru
          _
      $region32: #{tpu_custom_call.1} parent=5 // pred_fallthru
        _
      %p380 = scmp.le.s32.totalorder 2, %s16
      // Predicated region
      $region41: #{tpu_custom_call.1} parent=5 // pred_check
        %p381 = pneg %p380
      $region42: #{tpu_custom_call.1} parent=5 // pred_check_branch
        %383 = sbr.rel (%p381) target = $region44
      $region43: #{tpu_custom_call.1} parent=5 // pred_region
        %s384 = ssub.s32 %s16, 2
        // Predicated region
        $region45: #{tpu_custom_call.1} parent=43 // pred_check
          %p385 = pneg %p113
        $region46: #{tpu_custom_call.1} parent=43 // pred_check_branch
          %387 = sbr.rel (%p385) target = $region48
        $region47: #{tpu_custom_call.1} parent=43 // pred_region
          %s388 = sand.u32 %s98, 1
          %s389 = scalar_lea.sflag [#allocation5], %s388
          %s390 = sand.u32 %s98, 1
          %s391 = smul.addr %s390, 8
          %s392 = scalar_lea.vmem [#allocation6], %s391
          %393 = dma.done %s389, 128
        $region48: #{tpu_custom_call.1} parent=43 // pred_fallthru
          _
      $region44: #{tpu_custom_call.1} parent=5 // pred_fallthru
        _
    $region6: #{tpu_custom_call.1} parent=1 // loop_footer
      %s20 = sadd.s32 1, %s16
    $region7: #{tpu_custom_call.1} parent=1 // loop_footer_branch
      %15 = sbr.rel target = $region3
    $region8: #{tpu_custom_call.1} parent=1 // loop_exit
      _
    %394 = vsyncpa [#allocation4], 1
    %s395 = scalar_lea.sflag [#allocation4], 1
    %396 = vsyncpa %s395, 1
    %397 = vsyncpa [#allocation5], 1
    %s398 = scalar_lea.sflag [#allocation5], 1
    %399 = vsyncpa %s398, 1

</llo_original>
